<compile_context>
chip_gen: v7x
topology: tpu7x:2x2x1
jax: 0.10.0
libtpu: 0.0.40
codegen_flags: <defaults>
</compile_context>

<pallas_src>
import functools
import math

import jax
import jax.numpy as jnp
from jax.experimental import pallas as pl
from jax.experimental.pallas import tpu as pltpu

_LANE = 128
_MIN_DMA_RUN_BYTES = 512        # below this, a strided (column-sliced) read hurts
_TARGET_GRID_STEPS = 8          # enough steps for v7x's 2 TCs to share the grid
_MAX_BUFFER_BUDGET = 16 * 1024 * 1024


# ---------------------------------------------------------------------------
# Kernels
# ---------------------------------------------------------------------------

def _copy_kernel(x_ref, o_ref):
    # Input block is already column-sliced/tiled by the BlockSpec: VMEM copy.
    o_ref[...] = x_ref[...]


def _slice_copy_kernel(x_ref, o_ref, *, output_size: int):
    # Input block still carries extra columns; drop them with a static slice
    # (no cross-lane movement, just a narrower store).
    o_ref[...] = x_ref[:, :output_size]


# ---------------------------------------------------------------------------
# Tiling helpers
# ---------------------------------------------------------------------------

def _round_up(x: int, m: int) -> int:
    return -(-x // m) * m


def _round_down(x: int, m: int) -> int:
    return (x // m) * m


def _sublane_granule(dtype) -> int:
    """Second-to-last block-dim granule: 8 for 4B, 16 for 2B, 32 for 1B dtypes."""
    itemsize = jnp.dtype(dtype).itemsize
    if itemsize >= 4:
        return 8
    if itemsize == 2:
        return 16
    return 32


def _vmem_capacity_bytes() -> int:
    try:
        return int(pltpu.get_tpu_info().vmem_capacity_bytes)
    except Exception:
        return 64 * 1024 * 1024  # v7x per-TC floor; conservative default.


def _plan(rows: int, input_size: int, output_size: int, dtype, budget: int):
    """Pick grid / block shapes / kernel for the slice-copy.

    Returns a dict with grid, in/out block shapes, index maps, kernel, the
    dimension_semantics tuple, and an HBM-traffic estimate.
    """
    itemsize = jnp.dtype(dtype).itemsize
    granule = _sublane_granule(dtype)

    def row_tile(in_cols: int) -> int:
        """Row tile for a 1-D grid: fits the double-buffered VMEM budget,
        granule-aligned, and small enough to give ~_TARGET_GRID_STEPS steps."""
        if rows < granule:
            return rows  # block equals the full row extent (legal).
        bytes_per_row = 2 * (in_cols + output_size) * itemsize  # 2x: double-buffer
        by_budget = max(granule, _round_down(budget // bytes_per_row, granule))
        by_steps = max(granule,
                       _round_down(pl.cdiv(rows, _TARGET_GRID_STEPS), granule))
        return min(by_budget, by_steps, _round_down(rows, granule))

    def one_d(in_cols: int, body_slice: bool):
        tr = row_tile(in_cols)
        kernel = (functools.partial(_slice_copy_kernel, output_size=output_size)
                  if body_slice else _copy_kernel)
        return dict(
            grid=(pl.cdiv(rows, tr),),
            in_block=(tr, in_cols),
            out_block=(tr, output_size),
            in_map=lambda i: (i, 0),
            out_map=lambda i: (i, 0),
            kernel=kernel,
            dims=("parallel",),
            bytes_accessed=rows * (in_cols + output_size) * itemsize,
        )

    # ---- column read strategy -------------------------------------------
    ru_out = _round_up(output_size, _LANE)
    # Slice at DMA time only when the per-row read run stays DMA-efficient.
    exact_dma_slice = (output_size % _LANE == 0
                       and output_size * itemsize >= _MIN_DMA_RUN_BYTES)
    # Otherwise, optionally read a lane-aligned prefix (skips most padding
    # columns) when the run is still >= 512 B and it saves >= 2x traffic.
    prefix_ok = (ru_out <= input_size
                 and ru_out * itemsize >= _MIN_DMA_RUN_BYTES
                 and input_size >= 2 * ru_out)

    if exact_dma_slice:
        in_cols, body_slice = output_size, False
    elif prefix_ok:
        in_cols, body_slice = ru_out, True
    else:
        in_cols, body_slice = input_size, True

    granule_rows = min(rows, granule)
    over_budget = 2 * (in_cols + output_size) * itemsize * granule_rows > budget

    if not over_budget:
        return one_d(in_cols, body_slice)

    # ---- very wide feature dims: keep tiles inside the VMEM budget --------
    if output_size < _LANE:
        # Single output column block (full dim); read a 128-column prefix of
        # the (huge) input row and slice in the body.
        return one_d(_LANE, True)

    # 2-D column tiling: copy kernel, column blocks map 1:1 input->output
    # (output is the leading prefix of the input), ragged edges masked.
    by_budget_cols = _round_down(budget // (4 * itemsize * granule_rows), _LANE)
    tile_cols = max(_LANE, min(by_budget_cols, _round_down(output_size, _LANE)))
    if rows < granule:
        tr = rows
    else:
        per_row = 4 * tile_cols * itemsize  # in + out, double-buffered
        tr = min(_round_down(rows, granule),
                 max(granule, _round_down(budget // per_row, granule)))
    return dict(
        grid=(pl.cdiv(rows, tr), pl.cdiv(output_size, tile_cols)),
        in_block=(tr, tile_cols),
        out_block=(tr, tile_cols),
        in_map=lambda i, j: (i, j),
        out_map=lambda i, j: (i, j),
        kernel=_copy_kernel,
        dims=("parallel", "parallel"),
        bytes_accessed=2 * rows * output_size * itemsize,
    )


# ---------------------------------------------------------------------------
# Forward wrapper
# ---------------------------------------------------------------------------

@functools.partial(jax.jit, static_argnums=(1, 2))
def concat_projection_forward(x: jax.Array, output_size: int,
                              buffer_budget_bytes: int | None = None) -> jax.Array:
    """y = x[..., :output_size] implemented with a Pallas copy kernel."""
    input_size = x.shape[-1]
    assert input_size >= output_size, (
        "ConcatProjection requires input_size >= output_size")

    # Identity fast path: padding_size == 0 -> no data movement at all.
    if output_size == input_size:
        return x

    lead_shape = x.shape[:-1]
    rows = math.prod(lead_shape) if lead_shape else 1

    # Degenerate shapes: nothing to move; let XLA emit the (empty) slice.
    if rows == 0 or output_size == 0 or input_size == 0:
        return x[..., :output_size]

    budget = buffer_budget_bytes
    if budget is None:
        budget = min(_vmem_capacity_bytes() // 4, _MAX_BUFFER_BUDGET)

    plan = _plan(rows, input_size, output_size, x.dtype, budget)

    x2d = x.reshape(rows, input_size)
    out2d = pl.pallas_call(
        plan["kernel"],
        out_shape=jax.ShapeDtypeStruct((rows, output_size), x.dtype),
        grid_spec=pltpu.PrefetchScalarGridSpec(
            num_scalar_prefetch=0,
            grid=plan["grid"],
            in_specs=[pl.BlockSpec(plan["in_block"], plan["in_map"])],
            out_specs=pl.BlockSpec(plan["out_block"], plan["out_map"]),
        ),
        compiler_params=pltpu.CompilerParams(
            dimension_semantics=plan["dims"],
            vmem_limit_bytes=min(_vmem_capacity_bytes() // 2, 64 * 1024 * 1024),
        ),
        cost_estimate=pl.CostEstimate(
            flops=0, transcendentals=0, bytes_accessed=plan["bytes_accessed"]),
    )(x2d)

    return out2d.reshape(*lead_shape, output_size)


# ---------------------------------------------------------------------------
# Module
# ---------------------------------------------------------------------------

class ConcatProjection:
    """JAX/Pallas port of linodenet ConcatProjection (forward = encode = slice)."""

    def __init__(self, input_size: int, output_size: int, *, key: jax.Array):
        assert input_size >= output_size
        self.input_size = input_size
        self.output_size = output_size
        self.padding_size = input_size - output_size
        # Deterministic parameter init (used only by decode, never by forward).
        self.padding = jax.random.normal(key, (self.padding_size,), dtype=jnp.float32)

    def __call__(self, x: jax.Array) -> jax.Array:
        return concat_projection_forward(x, self.output_size)

    def encode(self, x: jax.Array) -> jax.Array:
        return self(x)

    def decode(self, y: jax.Array) -> jax.Array:
        # Plain-JAX glue (not the hot path): concat the learned padding.
        pad = jnp.broadcast_to(
            self.padding.astype(y.dtype), y.shape[:-1] + (self.padding_size,)
        )
        return jnp.concatenate([y, pad], axis=-1)


# ---------------------------------------------------------------------------
# Self-test
# ---------------------------------------------------------------------------

if __name__ == "__main__":
    key = jax.random.PRNGKey(0)
    k_param, k_x, k_x2, k_x3, k_x4, k_x5 = jax.random.split(key, 6)

    # Primary case: z = [x, w] with 48 features, project to the first 32.
    input_size, output_size = 48, 32
    batch, seq = 2, 8
    module = ConcatProjection(input_size, output_size, key=k_param)
    x = jax.random.normal(k_x, (batch, seq, input_size), dtype=jnp.float32)
    y = jax.block_until_ready(module(x))
    assert y.shape == (batch, seq, output_size)
    assert y.dtype == x.dtype
    assert jnp.array_equal(y, x[..., :output_size])

    # Ragged row count (rows=21 -> masked tail block).
    x_ragged = jax.random.normal(k_x2, (3, 7, input_size), dtype=jnp.float32)
    y_ragged = jax.block_until_ready(concat_projection_forward(x_ragged, output_size))
    assert jnp.array_equal(y_ragged, x_ragged[..., :output_size])

    # bf16 path (sublane granule 16) with fewer rows than the granule.
    x_bf16 = jax.random.normal(k_x3, (5, input_size), dtype=jnp.bfloat16)
    y_bf16 = jax.block_until_ready(concat_projection_forward(x_bf16, output_size))
    assert jnp.array_equal(y_bf16, x_bf16[..., :output_size])

    # Lane-aligned f32 case: output run = 512 B -> slice happens at DMA time.
    x_wide = jax.random.normal(k_x, (4, 8, 256), dtype=jnp.float32)
    y_wide = jax.block_until_ready(concat_projection_forward(x_wide, 128))
    assert jnp.array_equal(y_wide, x_wide[..., :128])

    # Lane-aligned bf16 case: run only 256 B -> gated to contiguous read +
    # body slice (no strided DMA).
    x_bf16w = jax.random.normal(k_x4, (4, 16, 384), dtype=jnp.bfloat16)
    y_bf16w = jax.block_until_ready(concat_projection_forward(x_bf16w, 128))
    assert jnp.array_equal(y_bf16w, x_bf16w[..., :128])

    # Identity fast path: padding_size == 0 -> no kernel launch.
    y_id = jax.block_until_ready(concat_projection_forward(x, input_size))
    assert jnp.array_equal(y_id, x)

    # Forced column-tiling path (tiny test budget stands in for "very wide
    # feature dim"): 2-D grid, ragged output column block.
    x_ct = jax.random.normal(k_x5, (64, 1024), dtype=jnp.float32)
    y_ct = jax.block_until_ready(concat_projection_forward(x_ct, 700, 64 * 1024))
    assert jnp.array_equal(y_ct, x_ct[..., :700])

    # Forced prefix-read path (output < 128 lanes, budget-pressured input).
    x_pf = jax.random.normal(k_x5, (32, 2048), dtype=jnp.float32)
    y_pf = jax.block_until_ready(concat_projection_forward(x_pf, 64, 4096))
    assert jnp.array_equal(y_pf, x_pf[..., :64])

    print("KERNEL_OK")
</pallas_src>

<mosaic_0001>
module attributes {stable_mosaic.version = 11 : i64} {
  func.func @_slice_copy_kernel(%arg0: i32, %arg1: memref<8x48xf32, #tpu.memory_space<vmem>>, %arg2: memref<8x32xf32, #tpu.memory_space<vmem>>) attributes {dimension_semantics = [#tpu.dimension_semantics<parallel>], iteration_bounds = array<i64: 2>, scalar_prefetch = 0 : i64, scratch_operands = 0 : i64, tpu.core_type = #tpu.core_type<tc>, window_params = [{transform_indices = @transform_0, window_bounds = array<i64: 8, 48>}, {transform_indices = @transform_1, window_bounds = array<i64: 8, 32>}]} {
    %c0 = arith.constant 0 : index
    %c0_0 = arith.constant 0 : index
    %0 = vector.load %arg1[%c0, %c0_0] : memref<8x48xf32, #tpu.memory_space<vmem>>, vector<8x32xf32>
    %c0_1 = arith.constant 0 : index
    %c0_2 = arith.constant 0 : index
    %1 = vector.load %arg2[%c0_1, %c0_2] : memref<8x32xf32, #tpu.memory_space<vmem>>, vector<8x32xf32>
    tpu.vector_store %arg2[%c0_1, %c0_2], %0 {strides = array<i32>} : memref<8x32xf32, #tpu.memory_space<vmem>>, vector<8x32xf32>,
    return
  }
  func.func @transform_0(%arg0: i32) -> (i32, i32) {
    %c0_i32 = arith.constant 0 : i32
    %c0_i32_0 = arith.constant 0 : i32
    return %arg0, %c0_i32 : i32, i32
  }
  func.func @transform_1(%arg0: i32) -> (i32, i32) {
    %c0_i32 = arith.constant 0 : i32
    %c0_i32_0 = arith.constant 0 : i32
    return %arg0, %c0_i32 : i32, i32
  }
}

</mosaic_0001>

<llo_original>
// kernel: concat_projection_forward.1
$region0: #{concat_projection_forward.1}
  #allocation0 [shape = 'u32[]', space=smem, size = 0x4, offset = 0x4, fixed_abs, tag = 'smem constant byte address 0x4 - core index']
  #allocation1 [shape = 'u32[144,128]{1,0:T(1,128)}', space=vmem, size = 0x12000, scoped, tag = 'internal scratch']
  %s0 = inlined_call_operand.hbm [shape: f32[16,48], index: 0, kind: input, shape index: {}]
  %s1 = inlined_call_operand.hbm [shape: f32[16,32], index: 1, kind: output, shape index: {}]
  %s2 = sld [smem:[#allocation0]]
  $region41: #{concat_projection_forward.1} parent=0
    _
  %s4 = ssub.s32 1, %s2
  %s5 = scalar_select 0, %s4, %s2
  $region1: #{concat_projection_forward.1} parent=0
    #allocation2 [shape = 'u8[8192]{0}', space=vmem, size = 0x2000, scoped, tag = 'input window, operand 0']
    #allocation3 [shape = 's32[2]{0}', space=sflag, size = 0x8, scoped, tag = 'scoped memory for concat_projection_forward.1']
    #allocation4 [shape = 's32[2]{0}', space=sflag, size = 0x8, scoped, tag = 'scoped memory for concat_projection_forward.1']
    #allocation5 [shape = 'u8[8192]{0}', space=vmem, size = 0x2000, scoped, tag = 'output window, operand 0']
    %6 = vsyncpa [#allocation3], 0
    %s7 = scalar_lea.sflag [#allocation3], 1
    %8 = vsyncpa %s7, 0
    %9 = vsyncpa [#allocation4], 0
    %s10 = scalar_lea.sflag [#allocation4], 1
    %11 = vsyncpa %s10, 0
    loop: start=0, step=1, limit=4
    $region2: #{concat_projection_forward.1} parent=1 // loop_pre_header
      _
    $region3: #{concat_projection_forward.1} parent=1 // loop_header
      %s13 = sphi 0, %s17
      %p14 = scmp.ge.s32.totalorder %s13, 4
      %s23 = sphi 0, %s25
      %s26 = sphi 0, %s23
      %s27 = sphi 0, %s26
      %s43 = sphi 0, %s27
      %s49 = sphi 0, %s51
      %s52 = sphi 0, %s49
      %s53 = sphi 0, %s52
      %s69 = sphi 0, %s53
    $region4: #{concat_projection_forward.1} parent=1 // loop_header_branch
      %16 = sbr.rel (%p14) target = $region8
    $region5: #{concat_projection_forward.1} parent=1 // loop_body
      %s18 = ssub.s32 %s13, 1
      %s19 = ssub.s32 %s13, 2
      %s20 = sadd.s32 %s13, 1
      %s21 = ssub.s32 %s13, %s20
      %p22 = scmp.eq.s32.totalorder %s21, 0
      %s24 = sadd.s32 %s23, 1
      %s25 = scalar_select %p22, %s23, %s24
      %p28 = pneg %p22
      %p29 = scmp.eq.s32.totalorder %s13, 1
      %p30 = por %p28, %p29
      %p31 = scmp.ne.s32.totalorder %s23, %s26
      %p32 = scmp.eq.s32.totalorder %s13, 0
      %p33 = por %p31, %p32
      %p34 = scmp.ne.s32.totalorder %s23, %s26
      %p35 = scmp.eq.s32.totalorder %s18, 1
      %p36 = por %p34, %p35
      %p37 = scmp.ne.s32.totalorder %s26, %s27
      %p38 = scmp.eq.s32.totalorder %s18, 0
      %p39 = por %p37, %p38
      %p40 = scmp.ne.s32.totalorder %s26, %s27
      %p41 = scmp.eq.s32.totalorder %s19, 1
      %p42 = por %p40, %p41
      %p44 = scmp.ne.s32.totalorder %s27, %s43
      %p45 = scmp.eq.s32.totalorder %s19, 0
      %p46 = por %p44, %p45
      %s47 = ssub.s32 %s13, %s20
      %p48 = scmp.eq.s32.totalorder %s47, 0
      %s50 = sadd.s32 %s49, 1
      %s51 = scalar_select %p48, %s49, %s50
      %p54 = pneg %p48
      %p55 = scmp.eq.s32.totalorder %s13, 1
      %p56 = por %p54, %p55
      %p57 = scmp.ne.s32.totalorder %s49, %s52
      %p58 = scmp.eq.s32.totalorder %s13, 0
      %p59 = por %p57, %p58
      %p60 = scmp.ne.s32.totalorder %s49, %s52
      %p61 = scmp.eq.s32.totalorder %s18, 1
      %p62 = por %p60, %p61
      %p63 = scmp.ne.s32.totalorder %s52, %s53
      %p64 = scmp.eq.s32.totalorder %s18, 0
      %p65 = por %p63, %p64
      %p66 = scmp.ne.s32.totalorder %s52, %s53
      %p67 = scmp.eq.s32.totalorder %s19, 1
      %p68 = por %p66, %p67
      %p70 = scmp.ne.s32.totalorder %s53, %s69
      %p71 = scmp.eq.s32.totalorder %s19, 0
      %p72 = por %p70, %p71
      %p73 = scmp.le.s32.totalorder 1, %s13
      %p74 = scmp.lt.s32.totalorder %s13, 3
      %p75 = pnand %p73, %p74
      %p76 = pneg %p75
      // Predicated region
      $region9: #{concat_projection_forward.1} parent=5 // pred_check
        _
      $region10: #{concat_projection_forward.1} parent=5 // pred_check_branch
        %78 = sbr.rel (%p75) target = $region12
      $region11: #{concat_projection_forward.1} parent=5 // pred_region
        %s79 = ssub.s32 %s13, 1
      $region12: #{concat_projection_forward.1} parent=5 // pred_fallthru
        _
      %p80 = scmp.lt.s32.totalorder %s13, 2
      // Predicated region
      $region13: #{concat_projection_forward.1} parent=5 // pred_check
        %p81 = pneg %p80
      $region14: #{concat_projection_forward.1} parent=5 // pred_check_branch
        %83 = sbr.rel (%p81) target = $region16
      $region15: #{concat_projection_forward.1} parent=5 // pred_region
        // Predicated region
        $region17: #{concat_projection_forward.1} parent=15 // pred_check
          %p84 = pneg %p33
        $region18: #{concat_projection_forward.1} parent=15 // pred_check_branch
          %86 = sbr.rel (%p84) target = $region20
        $region19: #{concat_projection_forward.1} parent=15 // pred_region
          %s87 = sand.u32 %s23, 1
          %s88 = scalar_lea.sflag [#allocation3], %s87
          %s89 = sand.u32 %s23, 1
          %s90 = smul.addr %s89, 8
          %s91 = scalar_lea.vmem [#allocation2], %s90
          %s93 = ssub.s32 128, 128
          %94 = vsyncadd %s88, %s93
          %s95 = smul.addr %s13, 128
          %s96 = scalar_lea.hbm %s0, %s95
          %s98 = sshll.u32 %s91, 4
          %s99 = int_to_ptr.vmem [resolvable:$true] %s98
          %101 = dma.hbm_to_vmem [thread:$0]  %s96, 128, %s99, %s88
        $region20: #{concat_projection_forward.1} parent=15 // pred_fallthru
          _
      $region16: #{concat_projection_forward.1} parent=5 // pred_fallthru
        _
      %p102 = scmp.le.s32.totalorder 1, %s13
      %p103 = scmp.lt.s32.totalorder %s13, 3
      %p104 = pnand %p102, %p103
      %p105 = pneg %p104
      // Predicated region
      $region21: #{concat_projection_forward.1} parent=5 // pred_check
        _
      $region22: #{concat_projection_forward.1} parent=5 // pred_check_branch
        %107 = sbr.rel (%p104) target = $region24
      $region23: #{concat_projection_forward.1} parent=5 // pred_region
        %s108 = ssub.s32 %s13, 1
        %s109 = sand.u32 %s26, 1
        %s110 = scalar_lea.sflag [#allocation3], %s109
        %s111 = sand.u32 %s26, 1
        %s112 = smul.addr %s111, 8
        %s113 = scalar_lea.vmem [#allocation2], %s112
        // Predicated region
        $region25: #{concat_projection_forward.1} parent=23 // pred_check
          %p114 = pneg %p39
        $region26: #{concat_projection_forward.1} parent=23 // pred_check_branch
          %116 = sbr.rel (%p114) target = $region28
        $region27: #{concat_projection_forward.1} parent=23 // pred_region
          %117 = dma.done %s110, 128
        $region28: #{concat_projection_forward.1} parent=23 // pred_fallthru
          _
        %s118 = sand.u32 %s26, 1
        %s119 = scalar_lea.sflag [#allocation3], %s118
        %s120 = sand.u32 %s26, 1
        %s121 = smul.addr %s120, 8
        %s122 = scalar_lea.vmem [#allocation2], %s121
        %p123 = pneg %p39
        %p124 = pneg %p36
        %p125 = pneg %p65
        %p126 = pneg %p62
        %s127 = sand.u32 %s52, 1
        %s128 = scalar_lea.sflag [#allocation4], %s127
        %s129 = sand.u32 %s52, 1
        %s130 = smul.addr %s129, 8
        %s131 = scalar_lea.vmem [#allocation5], %s130
        %v132 = vld [vmem:[%s113] sm:$0xff]
        %vm133 = vcmask 261120
        %134 = vst.msk [vmem:[%s131] sm:$0xff] %vm133, %v132
        %s135 = sand.u32 %s52, 1
        %s136 = scalar_lea.sflag [#allocation4], %s135
        %s137 = sand.u32 %s52, 1
        %s138 = smul.addr %s137, 8
        %s139 = scalar_lea.vmem [#allocation5], %s138
        // Predicated region
        $region29: #{concat_projection_forward.1} parent=23 // pred_check
          %p140 = pneg %p62
        $region30: #{concat_projection_forward.1} parent=23 // pred_check_branch
          %142 = sbr.rel (%p140) target = $region32
        $region31: #{concat_projection_forward.1} parent=23 // pred_region
          %s144 = ssub.s32 128, 128
          %145 = vsyncadd %s136, %s144
          %s146 = smul.addr %s18, 128
          %s147 = scalar_lea.hbm %s1, %s146
          %s149 = sshll.u32 %s139, 4
          %s150 = int_to_ptr.vmem [resolvable:$true] %s149
          %152 = dma.vmem_to_hbm [thread:$0]  %s150, 128, %s147, %s136
        $region32: #{concat_projection_forward.1} parent=23 // pred_fallthru
          _
      $region24: #{concat_projection_forward.1} parent=5 // pred_fallthru
        _
      %p153 = scmp.le.s32.totalorder 2, %s13
      // Predicated region
      $region33: #{concat_projection_forward.1} parent=5 // pred_check
        %p154 = pneg %p153
      $region34: #{concat_projection_forward.1} parent=5 // pred_check_branch
        %156 = sbr.rel (%p154) target = $region36
      $region35: #{concat_projection_forward.1} parent=5 // pred_region
        %s157 = ssub.s32 %s13, 2
        // Predicated region
        $region37: #{concat_projection_forward.1} parent=35 // pred_check
          %p158 = pneg %p68
        $region38: #{concat_projection_forward.1} parent=35 // pred_check_branch
          %160 = sbr.rel (%p158) target = $region40
        $region39: #{concat_projection_forward.1} parent=35 // pred_region
          %s161 = sand.u32 %s53, 1
          %s162 = scalar_lea.sflag [#allocation4], %s161
          %s163 = sand.u32 %s53, 1
          %s164 = smul.addr %s163, 8
          %s165 = scalar_lea.vmem [#allocation5], %s164
          %166 = dma.done %s162, 128
        $region40: #{concat_projection_forward.1} parent=35 // pred_fallthru
          _
      $region36: #{concat_projection_forward.1} parent=5 // pred_fallthru
        _
    $region6: #{concat_projection_forward.1} parent=1 // loop_footer
      %s17 = sadd.s32 1, %s13
    $region7: #{concat_projection_forward.1} parent=1 // loop_footer_branch
      %12 = sbr.rel target = $region3
    $region8: #{concat_projection_forward.1} parent=1 // loop_exit
      _
    %167 = vsyncpa [#allocation3], 1
    %s168 = scalar_lea.sflag [#allocation3], 1
    %169 = vsyncpa %s168, 1
    %170 = vsyncpa [#allocation4], 1
    %s171 = scalar_lea.sflag [#allocation4], 1
    %172 = vsyncpa %s171, 1

</llo_original>
